<compile_context>
chip_gen: v6e
topology: v6e:2x2x1
jax: 0.10.0
libtpu: 0.0.40
codegen_flags: <defaults>
</compile_context>

<pallas_src>
import jax
import jax.numpy as jnp
from jax.experimental import pallas as pl
from jax.experimental.pallas import tpu as pltpu


def mlp_kernel(x_ref, w1_ref, b1_ref, w2_ref, b2_ref, o_ref, acc_ref):
    # x_ref: (TB, D_in)      w1_ref: (D_in, TH)   b1_ref: (1, TH)  [f32]
    # w2_ref: (TH, Dop)      b2_ref: (1, Dop)     o_ref: (TB, Dop)
    # acc_ref: (TB, Dop) f32 scratch, accumulated over the hidden grid axis.
    h_idx = pl.program_id(1)

    @pl.when(h_idx == 0)
    def _():
        acc_ref[...] = jnp.zeros_like(acc_ref)

    # fc1 chunk: MXU matmul with f32 accumulation, bias added on the f32 acc.
    h = jnp.dot(x_ref[...], w1_ref[...], preferred_element_type=jnp.float32)
    h = h + b1_ref[...]

    # SiLU on this hidden chunk (sigmoid -> EUP slot, mul -> VPU).
    h = h * jax.nn.sigmoid(h)

    # fc2 chunk: feed the MXU in the weight dtype, accumulate in f32.
    acc_ref[...] += jnp.dot(h.astype(w2_ref.dtype), w2_ref[...],
                            preferred_element_type=jnp.float32)

    @pl.when(h_idx == pl.num_programs(1) - 1)
    def _():
        # Single cast at the lane-dense final store.
        o_ref[...] = (acc_ref[...] + b2_ref[...]).astype(o_ref.dtype)


def _round_up(n, m):
    return ((n + m - 1) // m) * m


def _tpu_generation_info():
    """Best-effort (VMEM capacity bytes, TensorCores per chip)."""
    vmem_cap = 64 * 1024 * 1024      # conservative default (v7x-sized VMEM)
    num_cores = 1
    try:
        info = pltpu.get_tpu_info()
        vmem_cap = int(getattr(info, "vmem_capacity_bytes", vmem_cap))
        num_cores = int(getattr(info, "num_cores", num_cores) or num_cores)
    except Exception:
        pass
    try:
        kind = jax.devices()[0].device_kind.lower()
        if "v7" in kind:
            num_cores = max(num_cores, 2)
    except Exception:
        pass
    return vmem_cap, num_cores


def mlp_forward(x, w1, b1, w2, b2, *, tile_b=None, tile_h=None,
                compute_dtype=None):
    B, d_in = x.shape
    h_dim = w1.shape[1]
    d_out = w2.shape[1]
    out_dtype = x.dtype

    # ---- Uniform MXU feed: activations in the weight dtype --------------
    if compute_dtype is not None:
        x = x.astype(compute_dtype)
        w1 = w1.astype(compute_dtype)
        w2 = w2.astype(compute_dtype)
    elif x.dtype != w1.dtype:
        x = x.astype(w1.dtype)   # avoid the silent mixed-dtype (slow) MXU path

    # ---- Lane-dense padding of feature dims (multiples of 128) ----------
    hp = _round_up(h_dim, 128)
    dop = _round_up(d_out, 128)
    if hp != h_dim:
        w1 = jnp.pad(w1, ((0, 0), (0, hp - h_dim)))
        b1 = jnp.pad(b1, (0, hp - h_dim))
        w2 = jnp.pad(w2, ((0, hp - h_dim), (0, 0)))
    if dop != d_out:
        w2 = jnp.pad(w2, ((0, 0), (0, dop - d_out)))
        b2 = jnp.pad(b2, (0, dop - d_out))

    # Biases kept in f32: added on the f32 MXU accumulator.
    b1_2d = b1.reshape(1, hp).astype(jnp.float32)
    b2_2d = b2.reshape(1, dop).astype(jnp.float32)

    vmem_cap, num_cores = _tpu_generation_info()
    budget = int(0.75 * vmem_cap)

    x_isz = jnp.dtype(x.dtype).itemsize
    w_isz = jnp.dtype(w1.dtype).itemsize
    o_isz = jnp.dtype(out_dtype).itemsize
    sub = 16 if x_isz == 2 else 8            # sublane multiple for tile_b

    # ---- Hidden tile: multiple of 128 that divides Hp --------------------
    if tile_h is None:
        tile_h = min(hp, 512)
    tile_h = max(128, (int(tile_h) // 128) * 128)
    while hp % tile_h:
        tile_h -= 128

    # ---- Batch tile: big on single-TC parts, moderate on multi-TC --------
    if tile_b is None:
        cap = 512 if num_cores <= 1 else 256
        tile_b = min(cap, _round_up(B, sub))
    tile_b = max(sub, _round_up(min(int(tile_b), _round_up(B, sub)), sub))

    def vmem_est(tb, th):
        return (2 * tb * d_in * x_isz          # x tile (double-buffered)
                + 2 * d_in * th * w_isz        # w1 hidden tile
                + 2 * th * 4                   # b1 tile (f32)
                + 2 * th * dop * w_isz         # w2 hidden tile
                + 1 * dop * 4                  # b2 (single-buffered)
                + 2 * tb * dop * o_isz         # output tile
                + tb * dop * 4                 # f32 accumulator scratch
                + tb * th * 4)                 # f32 hidden intermediate

    # Shrink tiles until comfortably under this generation's VMEM budget.
    while vmem_est(tile_b, tile_h) > budget // 2:
        if tile_h > 128:
            tile_h = max(128, ((tile_h // 2) // 128) * 128)
            while hp % tile_h:
                tile_h -= 128
        elif tile_b > sub:
            tile_b = max(sub, _round_up(tile_b // 2, sub))
        else:
            break

    # On multi-TC parts prefer an even number of batch steps so both
    # TensorCores get equal work (batch axis is "parallel").
    steps_b = pl.cdiv(B, tile_b)
    if num_cores >= 2 and steps_b % 2 == 1:
        half = _round_up((tile_b + 1) // 2, sub)
        if half < tile_b and pl.cdiv(B, half) % 2 == 0:
            tile_b = half
            steps_b = pl.cdiv(B, tile_b)

    # ---- Ragged batch: pad to a tile_b multiple (no divisibility assert) -
    Bp = steps_b * tile_b
    if Bp != B:
        x = jnp.pad(x, ((0, Bp - B), (0, 0)))

    grid = (steps_b, hp // tile_h)             # reduction (hidden) axis last

    est = vmem_est(tile_b, tile_h)
    vmem_limit = int(min(budget, max(32 * 1024 * 1024, 2 * est)))

    cost = pl.CostEstimate(
        flops=2 * Bp * (d_in * hp + hp * dop),
        transcendentals=Bp * hp,
        bytes_accessed=(Bp * d_in * x_isz + d_in * hp * w_isz
                        + hp * dop * w_isz + (hp + dop) * 4
                        + Bp * dop * o_isz),
    )

    out = pl.pallas_call(
        mlp_kernel,
        out_shape=jax.ShapeDtypeStruct((Bp, dop), out_dtype),
        grid=grid,
        in_specs=[
            pl.BlockSpec((tile_b, d_in), lambda i, h: (i, 0)),     # x (batch tile)
            pl.BlockSpec((d_in, tile_h), lambda i, h: (0, h)),     # w1 (hidden tile)
            pl.BlockSpec((1, tile_h), lambda i, h: (0, h)),        # b1 (f32)
            pl.BlockSpec((tile_h, dop), lambda i, h: (h, 0)),      # w2 (hidden tile)
            pl.BlockSpec((1, dop), lambda i, h: (0, 0),            # b2 (constant)
                         pipeline_mode=pl.Buffered(1)),
        ],
        out_specs=pl.BlockSpec((tile_b, dop), lambda i, h: (i, 0)),
        scratch_shapes=[pltpu.VMEM((tile_b, dop), jnp.float32)],
        compiler_params=pltpu.CompilerParams(
            dimension_semantics=("parallel", "arbitrary"),
            vmem_limit_bytes=vmem_limit,
        ),
        cost_estimate=cost,
    )(x, w1, b1_2d, w2, b2_2d)

    out = out[:B] if Bp != B else out
    return out[:, :d_out] if dop != d_out else out


def reference_mlp(x, w1, b1, w2, b2):
    h = jnp.dot(x, w1, precision="highest") + b1
    h = h * jax.nn.sigmoid(h)
    return jnp.dot(h, w2, precision="highest") + b2


if __name__ == "__main__":
    # Small shapes consistent with MLP(input_dim, output_dim, hidden_dim).
    # B=50 exercises the ragged-batch padding path, output_dim=48 exercises
    # the lane-dense pad-to-128 output path, and tile_h=128 exercises the
    # hidden-dim accumulator (2 reduction steps).
    B = 50
    input_dim, hidden_dim, output_dim = 32, 256, 48

    key = jax.random.PRNGKey(0)
    kx, k1, kb1, k2, kb2 = jax.random.split(key, 5)

    # Deterministic parameter init (PyTorch Linear-style uniform bounds).
    bound1 = 1.0 / (input_dim ** 0.5)
    bound2 = 1.0 / (hidden_dim ** 0.5)
    x = jax.random.normal(kx, (B, input_dim), dtype=jnp.float32)
    w1 = jax.random.uniform(k1, (input_dim, hidden_dim), jnp.float32, -bound1, bound1)
    b1 = jax.random.uniform(kb1, (hidden_dim,), jnp.float32, -bound1, bound1)
    w2 = jax.random.uniform(k2, (hidden_dim, output_dim), jnp.float32, -bound2, bound2)
    b2 = jax.random.uniform(kb2, (output_dim,), jnp.float32, -bound2, bound2)

    out = mlp_forward(x, w1, b1, w2, b2, tile_h=128)
    out = jax.block_until_ready(out)

    ref = reference_mlp(x, w1, b1, w2, b2)
    assert out.shape == (B, output_dim), out.shape
    err = float(jnp.max(jnp.abs(out - ref)))
    assert jnp.allclose(out, ref, atol=2e-3, rtol=2e-3), (
        f"mismatch vs reference (max abs err {err})")

    print("KERNEL_OK")
</pallas_src>

<mosaic_0001>
module attributes {stable_mosaic.version = 11 : i64} {
  func.func @mlp_kernel(%arg0: i32, %arg1: i32, %arg2: memref<56x32xf32, #tpu.memory_space<vmem>>, %arg3: memref<32x128xf32, #tpu.memory_space<vmem>>, %arg4: memref<1x128xf32, #tpu.memory_space<vmem>>, %arg5: memref<128x128xf32, #tpu.memory_space<vmem>>, %arg6: memref<1x128xf32, #tpu.memory_space<vmem>>, %arg7: memref<56x128xf32, #tpu.memory_space<vmem>>, %arg8: memref<56x128xf32, #tpu.memory_space<vmem>>) attributes {dimension_semantics = [#tpu.dimension_semantics<parallel>, #tpu.dimension_semantics<arbitrary>], iteration_bounds = array<i64: 1, 2>, scalar_prefetch = 0 : i64, scratch_operands = 1 : i64, tpu.core_type = #tpu.core_type<tc>, window_params = [{transform_indices = @transform_0, window_bounds = array<i64: 56, 32>}, {transform_indices = @transform_1, window_bounds = array<i64: 32, 128>}, {transform_indices = @transform_2, window_bounds = array<i64: 1, 128>}, {transform_indices = @transform_3, window_bounds = array<i64: 128, 128>}, {pipeline_mode = #tpu.pipeline_mode<synchronous>, transform_indices = @transform_4, window_bounds = array<i64: 1, 128>}, {transform_indices = @transform_5, window_bounds = array<i64: 56, 128>}]} {
    %c0_i32 = arith.constant 0 : i32
    %0 = arith.cmpi eq, %arg1, %c0_i32 : i32
    %1 = arith.extui %0 : i1 to i32
    %c0_i32_0 = arith.constant 0 : i32
    %2 = arith.cmpi ne, %1, %c0_i32_0 : i32
    scf.if %2 {
      %cst_15 = arith.constant 0.000000e+00 : f32
      %23 = vector.broadcast %cst_15 : f32 to vector<56x128xf32>
      %c0_16 = arith.constant 0 : index
      %c0_17 = arith.constant 0 : index
      %24 = vector.load %arg8[%c0_16, %c0_17] : memref<56x128xf32, #tpu.memory_space<vmem>>, vector<56x128xf32>
      tpu.vector_store %arg8[%c0_16, %c0_17], %23 {strides = array<i32>} : memref<56x128xf32, #tpu.memory_space<vmem>>, vector<56x128xf32>,
    } else {
    }
    %c0 = arith.constant 0 : index
    %c0_1 = arith.constant 0 : index
    %3 = vector.load %arg2[%c0, %c0_1] : memref<56x32xf32, #tpu.memory_space<vmem>>, vector<56x32xf32>
    %c0_2 = arith.constant 0 : index
    %c0_3 = arith.constant 0 : index
    %4 = vector.load %arg3[%c0_2, %c0_3] : memref<32x128xf32, #tpu.memory_space<vmem>>, vector<32x128xf32>
    %cst = arith.constant dense<0.000000e+00> : vector<56x128xf32>
    %5 = tpu.matmul %3, %4, %cst {dimension_numbers = #tpu.dot_dimension_numbers<[1], [0], [0], [1], [0, 0, 1, 1], [], []>} : vector<56x32xf32>, vector<32x128xf32>, vector<56x128xf32> -> vector<56x128xf32>
    %c0_4 = arith.constant 0 : index
    %c0_5 = arith.constant 0 : index
    %6 = vector.load %arg4[%c0_4, %c0_5] : memref<1x128xf32, #tpu.memory_space<vmem>>, vector<1x128xf32>
    %7 = vector.broadcast %6 : vector<1x128xf32> to vector<56x128xf32>
    %8 = arith.addf %5, %7 : vector<56x128xf32>
    %9 = arith.negf %8 : vector<56x128xf32>
    %10 = math.exp %9 : vector<56x128xf32>
    %cst_6 = arith.constant 1.000000e+00 : f32
    %11 = vector.broadcast %cst_6 : f32 to vector<56x128xf32>
    %12 = arith.addf %11, %10 : vector<56x128xf32>
    %13 = arith.divf %11, %12 : vector<56x128xf32>
    %14 = arith.mulf %8, %13 : vector<56x128xf32>
    %c0_7 = arith.constant 0 : index
    %c0_8 = arith.constant 0 : index
    %15 = vector.load %arg8[%c0_7, %c0_8] : memref<56x128xf32, #tpu.memory_space<vmem>>, vector<56x128xf32>
    %c0_9 = arith.constant 0 : index
    %c0_10 = arith.constant 0 : index
    %16 = vector.load %arg5[%c0_9, %c0_10] : memref<128x128xf32, #tpu.memory_space<vmem>>, vector<128x128xf32>
    %cst_11 = arith.constant dense<0.000000e+00> : vector<56x128xf32>
    %17 = tpu.matmul %14, %16, %cst_11 {dimension_numbers = #tpu.dot_dimension_numbers<[1], [0], [0], [1], [0, 0, 1, 1], [], []>} : vector<56x128xf32>, vector<128x128xf32>, vector<56x128xf32> -> vector<56x128xf32>
    %18 = arith.addf %15, %17 : vector<56x128xf32>
    %c0_12 = arith.constant 0 : index
    %c0_13 = arith.constant 0 : index
    %19 = vector.load %arg8[%c0_12, %c0_13] : memref<56x128xf32, #tpu.memory_space<vmem>>, vector<56x128xf32>
    tpu.vector_store %arg8[%c0_12, %c0_13], %18 {strides = array<i32>} : memref<56x128xf32, #tpu.memory_space<vmem>>, vector<56x128xf32>,
    %c1_i32 = arith.constant 1 : i32
    %20 = arith.cmpi eq, %arg1, %c1_i32 : i32
    %21 = arith.extui %20 : i1 to i32
    %c0_i32_14 = arith.constant 0 : i32
    %22 = arith.cmpi ne, %21, %c0_i32_14 : i32
    scf.if %22 {
      %c0_15 = arith.constant 0 : index
      %c0_16 = arith.constant 0 : index
      %23 = vector.load %arg8[%c0_15, %c0_16] : memref<56x128xf32, #tpu.memory_space<vmem>>, vector<56x128xf32>
      %c0_17 = arith.constant 0 : index
      %c0_18 = arith.constant 0 : index
      %24 = vector.load %arg6[%c0_17, %c0_18] : memref<1x128xf32, #tpu.memory_space<vmem>>, vector<1x128xf32>
      %25 = vector.broadcast %24 : vector<1x128xf32> to vector<56x128xf32>
      %26 = arith.addf %23, %25 : vector<56x128xf32>
      %c0_19 = arith.constant 0 : index
      %c0_20 = arith.constant 0 : index
      %27 = vector.load %arg7[%c0_19, %c0_20] : memref<56x128xf32, #tpu.memory_space<vmem>>, vector<56x128xf32>
      tpu.vector_store %arg7[%c0_19, %c0_20], %26 {strides = array<i32>} : memref<56x128xf32, #tpu.memory_space<vmem>>, vector<56x128xf32>,
    } else {
    }
    return
  }
  func.func @transform_0(%arg0: i32, %arg1: i32) -> (i32, i32) {
    %c0_i32 = arith.constant 0 : i32
    %c0_i32_0 = arith.constant 0 : i32
    return %arg0, %c0_i32 : i32, i32
  }
  func.func @transform_1(%arg0: i32, %arg1: i32) -> (i32, i32) {
    %c0_i32 = arith.constant 0 : i32
    %c0_i32_0 = arith.constant 0 : i32
    return %c0_i32, %arg1 : i32, i32
  }
  func.func @transform_2(%arg0: i32, %arg1: i32) -> (i32, i32) {
    %c0_i32 = arith.constant 0 : i32
    %c0_i32_0 = arith.constant 0 : i32
    return %c0_i32, %arg1 : i32, i32
  }
  func.func @transform_3(%arg0: i32, %arg1: i32) -> (i32, i32) {
    %c0_i32 = arith.constant 0 : i32
    %c0_i32_0 = arith.constant 0 : i32
    return %arg1, %c0_i32 : i32, i32
  }
  func.func @transform_4(%arg0: i32, %arg1: i32) -> (i32, i32) {
    %c0_i32 = arith.constant 0 : i32
    %c0_i32_0 = arith.constant 0 : i32
    %c0_i32_1 = arith.constant 0 : i32
    return %c0_i32, %c0_i32_0 : i32, i32
  }
  func.func @transform_5(%arg0: i32, %arg1: i32) -> (i32, i32) {
    %c0_i32 = arith.constant 0 : i32
    %c0_i32_0 = arith.constant 0 : i32
    return %arg0, %c0_i32 : i32, i32
  }
}

</mosaic_0001>

<llo_original>
// kernel: tpu_custom_call.1
$region0: #{tpu_custom_call.1}
  #allocation0 [shape = 'u32[]', space=smem, size = 0x4, offset = 0x4, fixed_abs, tag = 'smem constant byte address 0x4 - core index']
  #allocation1 [shape = 'u32[144,128]{1,0:T(1,128)}', space=vmem, size = 0x12000, scoped, tag = 'internal scratch']
  #allocation2 [shape = 'f32[56,128]{1,0:T(8,128)}', space=vmem, size = 0x7000, scoped, tag = 'scratch operand']
  %s0 = inlined_call_operand.vmem [shape: f32[56,32], index: 0, kind: input, shape index: {}]
  %s1 = inlined_call_operand.vmem [shape: f32[32,256], index: 1, kind: input, shape index: {}]
  %s2 = inlined_call_operand.vmem [shape: f32[1,256], index: 2, kind: input, shape index: {}]
  %s3 = inlined_call_operand.hbm [shape: f32[256,128], index: 3, kind: input, shape index: {}]
  %s4 = inlined_call_operand.vmem [shape: f32[1,128], index: 4, kind: input, shape index: {}]
  %s5 = inlined_call_operand.hbm [shape: f32[56,128], index: 5, kind: output, shape index: {}]
  %s6 = sld [smem:[#allocation0]]
  $region103: #{tpu_custom_call.1} parent=0
    _
  %s8 = ssub.s32 1, %s6
  %s9 = scalar_select 0, %s8, %s6
  $region1: #{tpu_custom_call.1} parent=0
    #allocation3 [shape = 'u8[32768]{0}', space=vmem, size = 0x8000, scoped, tag = 'input window, operand 1']
    #allocation4 [shape = 'u8[131072]{0}', space=vmem, size = 0x20000, scoped, tag = 'input window, operand 3']
    #allocation5 [shape = 's32[2]{0}', space=sflag, size = 0x8, scoped, tag = 'scoped memory for tpu_custom_call.1']
    #allocation6 [shape = 's32[2]{0}', space=sflag, size = 0x8, scoped, tag = 'scoped memory for tpu_custom_call.1']
    #allocation7 [shape = 'u8[28672]{0}', space=vmem, size = 0x7000, scoped, tag = 'output window, operand 0, single buffered']
    %10 = vsyncpa [#allocation5], 0
    %s11 = scalar_lea.sflag [#allocation5], 1
    %12 = vsyncpa %s11, 0
    %13 = vsyncpa [#allocation6], 0
    loop: start=0, step=1, limit=4
    $region2: #{tpu_custom_call.1} parent=1 // loop_pre_header
      _
    $region3: #{tpu_custom_call.1} parent=1 // loop_header
      %s15 = sphi 0, %s19
      %p16 = scmp.ge.s32.totalorder %s15, 4
      %s22 = sphi 0, %s34
      %s23 = sphi 0, %s30
      %s24 = sphi 0, %s22
      %s25 = sphi 0, %s23
      %s26 = sphi 0, %s24
      %s27 = sphi 0, %s25
      %s37 = sphi 0, %s39
      %s40 = sphi 0, %s37
      %s41 = sphi 0, %s40
      %s57 = sphi 0, %s41
      %s63 = sphi 0, %s65
      %s66 = sphi 0, %s63
      %s67 = sphi 0, %s66
      %s83 = sphi 0, %s67
      %s89 = sphi 0, %s91
      %s92 = sphi 0, %s89
      %s93 = sphi 0, %s92
      %s109 = sphi 0, %s93
      %s115 = sphi 0, %s117
      %s118 = sphi 0, %s115
      %s119 = sphi 0, %s118
      %s135 = sphi 0, %s119
      %s139 = sphi 0, %s139
      %s141 = sphi 0, %s139
      %s142 = sphi 0, %s141
      %s156 = sphi 0, %s142
      %s162 = sphi 0, %s164
      %s165 = sphi 0, %s162
      %s166 = sphi 0, %s165
      %s182 = sphi 0, %s166
    $region4: #{tpu_custom_call.1} parent=1 // loop_header_branch
      %18 = sbr.rel (%p16) target = $region8
    $region5: #{tpu_custom_call.1} parent=1 // loop_body
      %s20 = ssub.s32 %s15, 1
      %s21 = ssub.s32 %s15, 2
      %s28 = sadd.s32 1, %s23
      %p29 = scmp.ge.s32.totalorder %s28, 2
      %s30 = scalar_select %p29, 0, %s28
      %s31 = sadd.s32 1, %s22
      %s32 = scalar_select %p29, %s31, %s22
      %p33 = scmp.ge.s32.totalorder %s32, 1
      %s34 = scalar_select %p33, 0, %s32
      %s35 = ssub.s32 %s22, %s34
      %p36 = scmp.eq.s32.totalorder %s35, 0
      %s38 = sadd.s32 %s37, 1
      %s39 = scalar_select %p36, %s37, %s38
      %p42 = pneg %p36
      %p43 = scmp.eq.s32.totalorder %s15, 1
      %p44 = por %p42, %p43
      %p45 = scmp.ne.s32.totalorder %s37, %s40
      %p46 = scmp.eq.s32.totalorder %s15, 0
      %p47 = por %p45, %p46
      %p48 = scmp.ne.s32.totalorder %s37, %s40
      %p49 = scmp.eq.s32.totalorder %s20, 1
      %p50 = por %p48, %p49
      %p51 = scmp.ne.s32.totalorder %s40, %s41
      %p52 = scmp.eq.s32.totalorder %s20, 0
      %p53 = por %p51, %p52
      %p54 = scmp.ne.s32.totalorder %s40, %s41
      %p55 = scmp.eq.s32.totalorder %s21, 1
      %p56 = por %p54, %p55
      %p58 = scmp.ne.s32.totalorder %s41, %s57
      %p59 = scmp.eq.s32.totalorder %s21, 0
      %p60 = por %p58, %p59
      %s61 = ssub.s32 %s23, %s30
      %p62 = scmp.eq.s32.totalorder %s61, 0
      %s64 = sadd.s32 %s63, 1
      %s65 = scalar_select %p62, %s63, %s64
      %p68 = pneg %p62
      %p69 = scmp.eq.s32.totalorder %s15, 1
      %p70 = por %p68, %p69
      %p71 = scmp.ne.s32.totalorder %s63, %s66
      %p72 = scmp.eq.s32.totalorder %s15, 0
      %p73 = por %p71, %p72
      %p74 = scmp.ne.s32.totalorder %s63, %s66
      %p75 = scmp.eq.s32.totalorder %s20, 1
      %p76 = por %p74, %p75
      %p77 = scmp.ne.s32.totalorder %s66, %s67
      %p78 = scmp.eq.s32.totalorder %s20, 0
      %p79 = por %p77, %p78
      %p80 = scmp.ne.s32.totalorder %s66, %s67
      %p81 = scmp.eq.s32.totalorder %s21, 1
      %p82 = por %p80, %p81
      %p84 = scmp.ne.s32.totalorder %s67, %s83
      %p85 = scmp.eq.s32.totalorder %s21, 0
      %p86 = por %p84, %p85
      %s87 = ssub.s32 %s23, %s30
      %p88 = scmp.eq.s32.totalorder %s87, 0
      %s90 = sadd.s32 %s89, 1
      %s91 = scalar_select %p88, %s89, %s90
      %p94 = pneg %p88
      %p95 = scmp.eq.s32.totalorder %s15, 1
      %p96 = por %p94, %p95
      %p97 = scmp.ne.s32.totalorder %s89, %s92
      %p98 = scmp.eq.s32.totalorder %s15, 0
      %p99 = por %p97, %p98
      %p100 = scmp.ne.s32.totalorder %s89, %s92
      %p101 = scmp.eq.s32.totalorder %s20, 1
      %p102 = por %p100, %p101
      %p103 = scmp.ne.s32.totalorder %s92, %s93
      %p104 = scmp.eq.s32.totalorder %s20, 0
      %p105 = por %p103, %p104
      %p106 = scmp.ne.s32.totalorder %s92, %s93
      %p107 = scmp.eq.s32.totalorder %s21, 1
      %p108 = por %p106, %p107
      %p110 = scmp.ne.s32.totalorder %s93, %s109
      %p111 = scmp.eq.s32.totalorder %s21, 0
      %p112 = por %p110, %p111
      %s113 = ssub.s32 %s23, %s30
      %p114 = scmp.eq.s32.totalorder %s113, 0
      %s116 = sadd.s32 %s115, 1
      %s117 = scalar_select %p114, %s115, %s116
      %p120 = pneg %p114
      %p121 = scmp.eq.s32.totalorder %s15, 1
      %p122 = por %p120, %p121
      %p123 = scmp.ne.s32.totalorder %s115, %s118
      %p124 = scmp.eq.s32.totalorder %s15, 0
      %p125 = por %p123, %p124
      %p126 = scmp.ne.s32.totalorder %s115, %s118
      %p127 = scmp.eq.s32.totalorder %s20, 1
      %p128 = por %p126, %p127
      %p129 = scmp.ne.s32.totalorder %s118, %s119
      %p130 = scmp.eq.s32.totalorder %s20, 0
      %p131 = por %p129, %p130
      %p132 = scmp.ne.s32.totalorder %s118, %s119
      %p133 = scmp.eq.s32.totalorder %s21, 1
      %p134 = por %p132, %p133
      %p136 = scmp.ne.s32.totalorder %s119, %s135
      %p137 = scmp.eq.s32.totalorder %s21, 0
      %p138 = por %p136, %p137
      %s140 = sadd.s32 %s139, 1
      %p143 = scmp.eq.s32.totalorder %s15, 1
      %p144 = scmp.ne.s32.totalorder %s139, %s141
      %p145 = scmp.eq.s32.totalorder %s15, 0
      %p146 = por %p144, %p145
      %p147 = scmp.ne.s32.totalorder %s139, %s141
      %p148 = scmp.eq.s32.totalorder %s20, 1
      %p149 = por %p147, %p148
      %p150 = scmp.ne.s32.totalorder %s141, %s142
      %p151 = scmp.eq.s32.totalorder %s20, 0
      %p152 = por %p150, %p151
      %p153 = scmp.ne.s32.totalorder %s141, %s142
      %p154 = scmp.eq.s32.totalorder %s21, 1
      %p155 = por %p153, %p154
      %p157 = scmp.ne.s32.totalorder %s142, %s156
      %p158 = scmp.eq.s32.totalorder %s21, 0
      %p159 = por %p157, %p158
      %s160 = ssub.s32 %s22, %s34
      %p161 = scmp.eq.s32.totalorder %s160, 0
      %s163 = sadd.s32 %s162, 1
      %s164 = scalar_select %p161, %s162, %s163
      %p167 = pneg %p161
      %p168 = scmp.eq.s32.totalorder %s15, 1
      %p169 = por %p167, %p168
      %p170 = scmp.ne.s32.totalorder %s162, %s165
      %p171 = scmp.eq.s32.totalorder %s15, 0
      %p172 = por %p170, %p171
      %p173 = scmp.ne.s32.totalorder %s162, %s165
      %p174 = scmp.eq.s32.totalorder %s20, 1
      %p175 = por %p173, %p174
      %p176 = scmp.ne.s32.totalorder %s165, %s166
      %p177 = scmp.eq.s32.totalorder %s20, 0
      %p178 = por %p176, %p177
      %p179 = scmp.ne.s32.totalorder %s165, %s166
      %p180 = scmp.eq.s32.totalorder %s21, 1
      %p181 = por %p179, %p180
      %p183 = scmp.ne.s32.totalorder %s166, %s182
      %p184 = scmp.eq.s32.totalorder %s21, 0
      %p185 = por %p183, %p184
      %p186 = scmp.le.s32.totalorder 1, %s15
      %p187 = scmp.lt.s32.totalorder %s15, 3
      %p188 = pnand %p186, %p187
      %p189 = pneg %p188
      // Predicated region
      $region9: #{tpu_custom_call.1} parent=5 // pred_check
        _
      $region10: #{tpu_custom_call.1} parent=5 // pred_check_branch
        %191 = sbr.rel (%p188) target = $region12
      $region11: #{tpu_custom_call.1} parent=5 // pred_region
        %s192 = ssub.s32 %s15, 1
        // Predicated region
        $region13: #{tpu_custom_call.1} parent=11 // pred_check
          %p193 = pneg %p53
        $region14: #{tpu_custom_call.1} parent=11 // pred_check_branch
          %195 = sbr.rel (%p193) target = $region16
        $region15: #{tpu_custom_call.1} parent=11 // pred_region
          %s196 = smul.u32 7, %s24
          %p197 = scmp.lt.s32.totalorder %s196, 6
          %s198 = scalar_select %p197, %s196, 6
          %s199 = smul.addr %s198, 8
          %s200 = scalar_lea.vmem %s0, %s199
          %s201 = smul.u32 7, %s24
        $region16: #{tpu_custom_call.1} parent=11 // pred_fallthru
          _
        // Predicated region
        $region17: #{tpu_custom_call.1} parent=11 // pred_check
          %p202 = pneg %p152
        $region18: #{tpu_custom_call.1} parent=11 // pred_check_branch
          %204 = sbr.rel (%p202) target = $region20
        $region19: #{tpu_custom_call.1} parent=11 // pred_region
          _
        $region20: #{tpu_custom_call.1} parent=11 // pred_fallthru
          _
      $region12: #{tpu_custom_call.1} parent=5 // pred_fallthru
        _
      %p205 = scmp.lt.s32.totalorder %s15, 2
      // Predicated region
      $region21: #{tpu_custom_call.1} parent=5 // pred_check
        %p206 = pneg %p205
      $region22: #{tpu_custom_call.1} parent=5 // pred_check_branch
        %208 = sbr.rel (%p206) target = $region24
      $region23: #{tpu_custom_call.1} parent=5 // pred_region
        // Predicated region
        $region25: #{tpu_custom_call.1} parent=23 // pred_check
          %p209 = pneg %p73
        $region26: #{tpu_custom_call.1} parent=23 // pred_check_branch
          %211 = sbr.rel (%p209) target = $region28
        $region27: #{tpu_custom_call.1} parent=23 // pred_region
          %s212 = sand.u32 %s63, 1
          %s213 = sand.u32 %s63, 1
          %s214 = smul.addr %s213, 32
          %s215 = scalar_lea.vmem [#allocation3], %s214
          %s216 = smul.addr %s23, 8
          %s217 = scalar_lea.vmem %s1, %s216
          // Predicated region
          $region29: #{tpu_custom_call.1} parent=27 // pred_check
            _
          $region30: #{tpu_custom_call.1} parent=27 // pred_check_branch
            %219 = sbr.rel (0) target = $region32
          $region31: #{tpu_custom_call.1} parent=27 // pred_region
            // Predicated region
            $region33: #{tpu_custom_call.1} parent=31 // pred_check
              _
            $region34: #{tpu_custom_call.1} parent=31 // pred_check_branch
              %221 = sbr.rel (0) target = $region36
            $region35: #{tpu_custom_call.1} parent=31 // pred_region
              // Predicated region
              $region48: #{tpu_custom_call.1} parent=35 // pred_check
                _
              $region49: #{tpu_custom_call.1} parent=35 // pred_check_branch
                %243 = sbr.rel (0) target = $region51
              $region50: #{tpu_custom_call.1} parent=35 // pred_region
                loop: start=0, step=1, limit=1
                $region52: #{tpu_custom_call.1} parent=50 // loop_pre_header
                  _
                $region53: #{tpu_custom_call.1} parent=50 // loop_header
                  %s245 = sphi 0, %s249
                  %p246 = scmp.ge.s32.totalorder %s245, 1
                  %s250 = sphi %s217, %s217
                  %s251 = sphi %s215, %s215
                $region54: #{tpu_custom_call.1} parent=50 // loop_header_branch
                  %248 = sbr.rel (%p246) target = $region58
                $region55: #{tpu_custom_call.1} parent=50 // loop_body
                  %v252 = vld [vmem:[%s250] sm:$0xff]
                  %253 = vst [vmem:[%s251] sm:$0xff] %v252
                  %v254 = vld [vmem:[%s250 + $0x10] sm:$0xff]
                  %255 = vst [vmem:[%s251 + $0x8] sm:$0xff] %v254
                  %v256 = vld [vmem:[%s250 + $0x20] sm:$0xff]
                  %257 = vst [vmem:[%s251 + $0x10] sm:$0xff] %v256
                  %v258 = vld [vmem:[%s250 + $0x30] sm:$0xff]
                  %259 = vst [vmem:[%s251 + $0x18] sm:$0xff] %v258
                $region56: #{tpu_custom_call.1} parent=50 // loop_footer
                  %s249 = sadd.s32 1, %s245
                $region57: #{tpu_custom_call.1} parent=50 // loop_footer_branch
                  %244 = sbr.rel target = $region53
                $region58: #{tpu_custom_call.1} parent=50 // loop_exit
                  _
              $region51: #{tpu_custom_call.1} parent=35 // pred_fallthru
                _
              // Predicated region
              $region59: #{tpu_custom_call.1} parent=35 // pred_check
                _
              $region60: #{tpu_custom_call.1} parent=35 // pred_check_branch
                %261 = sbr.rel target = $region62
              $region61: #{tpu_custom_call.1} parent=35 // pred_region
                _
              $region62: #{tpu_custom_call.1} parent=35 // pred_fallthru
                _
            $region36: #{tpu_custom_call.1} parent=31 // pred_fallthru
              _
            // Predicated region
            $region37: #{tpu_custom_call.1} parent=31 // pred_check
              _
            $region38: #{tpu_custom_call.1} parent=31 // pred_check_branch
              %223 = sbr.rel target = $region40
            $region39: #{tpu_custom_call.1} parent=31 // pred_region
              %s225 = ssub.s32 256, 1
              loop: start=0, step=1, limit=1
              $region41: #{tpu_custom_call.1} parent=39 // loop_pre_header
                _
              $region42: #{tpu_custom_call.1} parent=39 // loop_header
                %s227 = sphi 0, %s231
                %p228 = scmp.ge.s32.totalorder %s227, 1
                %s232 = sphi %s217, %s217
                %s233 = sphi %s215, %s215
              $region43: #{tpu_custom_call.1} parent=39 // loop_header_branch
                %230 = sbr.rel (%p228) target = $region47
              $region44: #{tpu_custom_call.1} parent=39 // loop_body
                %v234 = vld [vmem:[%s232] sm:%s225]
                %235 = vst [vmem:[%s233] sm:%s225] %v234
                %v236 = vld [vmem:[%s232 + $0x10] sm:%s225]
                %237 = vst [vmem:[%s233 + $0x8] sm:%s225] %v236
                %v238 = vld [vmem:[%s232 + $0x20] sm:%s225]
                %239 = vst [vmem:[%s233 + $0x10] sm:%s225] %v238
                %v240 = vld [vmem:[%s232 + $0x30] sm:%s225]
                %241 = vst [vmem:[%s233 + $0x18] sm:%s225] %v240
              $region45: #{tpu_custom_call.1} parent=39 // loop_footer
                %s231 = sadd.s32 1, %s227
              $region46: #{tpu_custom_call.1} parent=39 // loop_footer_branch
                %226 = sbr.rel target = $region42
              $region47: #{tpu_custom_call.1} parent=39 // loop_exit
                _
            $region40: #{tpu_custom_call.1} parent=31 // pred_fallthru
              _
          $region32: #{tpu_custom_call.1} parent=27 // pred_fallthru
            _
          %262 = vnop
        $region28: #{tpu_custom_call.1} parent=23 // pred_fallthru
          _
        // Predicated region
        $region63: #{tpu_custom_call.1} parent=23 // pred_check
          %p263 = pneg %p99
        $region64: #{tpu_custom_call.1} parent=23 // pred_check_branch
          %265 = sbr.rel (%p263) target = $region66
        $region65: #{tpu_custom_call.1} parent=23 // pred_region
          %p266 = scmp.lt.s32.totalorder %s23, 1
          %s267 = scalar_select %p266, %s23, 1
          %s268 = scalar_lea.vmem %s2, %s267
        $region66: #{tpu_custom_call.1} parent=23 // pred_fallthru
          _
        // Predicated region
        $region67: #{tpu_custom_call.1} parent=23 // pred_check
          %p269 = pneg %p125
        $region68: #{tpu_custom_call.1} parent=23 // pred_check_branch
          %271 = sbr.rel (%p269) target = $region70
        $region69: #{tpu_custom_call.1} parent=23 // pred_region
          %s272 = sand.u32 %s115, 1
          %s273 = scalar_lea.sflag [#allocation5], %s272
          %s274 = sand.u32 %s115, 1
          %s275 = smul.addr %s274, 128
          %s276 = scalar_lea.vmem [#allocation4], %s275
          %s277 = smul.u32 16, %s23
          %s279 = ssub.s32 2048, 2048
          %280 = vsyncadd %s273, %s279
          %s281 = smul.addr %s277, 128
          %s282 = scalar_lea.hbm %s3, %s281
          %s283 = sshll.u32 %s276, 4
          %s284 = int_to_ptr.vmem [resolvable:$true] %s283
          %289 = dma.hbm_to_vmem [thread:$0]  %s282, 2048, %s284, %s273, 128, 128, 8
        $region70: #{tpu_custom_call.1} parent=23 // pred_fallthru
          _
      $region24: #{tpu_custom_call.1} parent=5 // pred_fallthru
        _
      %p290 = scmp.le.s32.totalorder 1, %s15
      %p291 = scmp.lt.s32.totalorder %s15, 3
      %p292 = pnand %p290, %p291
      %p293 = pneg %p292
      // Predicated region
      $region71: #{tpu_custom_call.1} parent=5 // pred_check
        _
      $region72: #{tpu_custom_call.1} parent=5 // pred_check_branch
        %295 = sbr.rel (%p292) target = $region74
      $region73: #{tpu_custom_call.1} parent=5 // pred_region
        %s296 = ssub.s32 %s15, 1
        %s297 = sand.u32 %s66, 1
        %s298 = sand.u32 %s66, 1
        %s299 = smul.addr %s298, 32
        %s300 = scalar_lea.vmem [#allocation3], %s299
        // Predicated region
        $region75: #{tpu_custom_call.1} parent=73 // pred_check
          %p301 = pneg %p79
        $region76: #{tpu_custom_call.1} parent=73 // pred_check_branch
          %303 = sbr.rel (%p301) target = $region78
        $region77: #{tpu_custom_call.1} parent=73 // pred_region
          _
        $region78: #{tpu_custom_call.1} parent=73 // pred_fallthru
          _
        %s304 = sand.u32 %s118, 1
        %s305 = scalar_lea.sflag [#allocation5], %s304
        %s306 = sand.u32 %s118, 1
        %s307 = smul.addr %s306, 128
        %s308 = scalar_lea.vmem [#allocation4], %s307
        // Predicated region
        $region79: #{tpu_custom_call.1} parent=73 // pred_check
          %p309 = pneg %p131
        $region80: #{tpu_custom_call.1} parent=73 // pred_check_branch
          %311 = sbr.rel (%p309) target = $region82
        $region81: #{tpu_custom_call.1} parent=73 // pred_region
          %312 = dma.done %s305, 2048
        $region82: #{tpu_custom_call.1} parent=73 // pred_fallthru
          _
        %s313 = smul.u32 7, %s24
        %p314 = scmp.lt.s32.totalorder %s313, 6
        %s315 = scalar_select %p314, %s313, 6
        %s316 = smul.addr %s315, 8
        %s317 = scalar_lea.vmem %s0, %s316
        %p318 = pneg %p53
        %p319 = pneg %p50
        %s320 = sand.u32 %s66, 1
        %s321 = sand.u32 %s66, 1
        %s322 = smul.addr %s321, 32
        %s323 = scalar_lea.vmem [#allocation3], %s322
        %p324 = pneg %p79
        %p325 = pneg %p76
        %p326 = scmp.lt.s32.totalorder %s25, 1
        %s327 = scalar_select %p326, %s25, 1
        %s328 = scalar_lea.vmem %s2, %s327
        %p329 = pneg %p105
        %p330 = pneg %p102
        %s331 = sand.u32 %s118, 1
        %s332 = scalar_lea.sflag [#allocation5], %s331
        %s333 = sand.u32 %s118, 1
        %s334 = smul.addr %s333, 128
        %s335 = scalar_lea.vmem [#allocation4], %s334
        %p336 = pneg %p131
        %p337 = pneg %p128
        %p338 = pneg %p152
        %p339 = pneg %p149
        %p340 = pneg %p178
        %p341 = pneg %p175
        %s342 = smul.u32 7, %s24
        %p343 = scmp.lt.s32.totalorder %s342, 6
        %s344 = scalar_select %p343, %s342, 6
        %s345 = smul.addr %s344, 8
        %s346 = scalar_lea.vmem %s0, %s345
        %s347 = smul.u32 7, %s24
        %p348 = scmp.lt.s32.totalorder %s25, 1
        %s349 = scalar_select %p348, %s25, 1
        %s350 = scalar_lea.vmem %s2, %s349
        %s351 = smul.u32 16, %s25
        %s352 = smul.u32 7, %s24
        %p353 = scmp.eq.s32.totalorder %s25, 0
        // Predicated region
        $region83: #{tpu_custom_call.1} parent=73 // pred_check
          %p354 = pneg %p353
        $region84: #{tpu_custom_call.1} parent=73 // pred_check_branch
          %356 = sbr.rel (%p354) target = $region86
        $region85: #{tpu_custom_call.1} parent=73 // pred_region
          %357 = vst [vmem:[#allocation2] sm:$0xff] 0.0
          %358 = vst [vmem:[#allocation2 + $0x8] sm:$0xff] 0.0
          %359 = vst [vmem:[#allocation2 + $0x10] sm:$0xff] 0.0
          %360 = vst [vmem:[#allocation2 + $0x18] sm:$0xff] 0.0
          %361 = vst [vmem:[#allocation2 + $0x20] sm:$0xff] 0.0
          %362 = vst [vmem:[#allocation2 + $0x28] sm:$0xff] 0.0
          %363 = vst [vmem:[#allocation2 + $0x30] sm:$0xff] 0.0
        $region86: #{tpu_custom_call.1} parent=73 // pred_fallthru
          _
        %v364 = vld [vmem:[%s346] sm:$0xff]
        %v365 = vld [vmem:[%s346 + $0x8] sm:$0xff]
        %v366 = vld [vmem:[%s346 + $0x10] sm:$0xff]
        %v367 = vld [vmem:[%s346 + $0x18] sm:$0xff]
        %v368 = vld [vmem:[%s346 + $0x20] sm:$0xff]
        %v369 = vld [vmem:[%s346 + $0x28] sm:$0xff]
        %v370 = vld [vmem:[%s346 + $0x30] sm:$0xff]
        %v371 = vld [vmem:[%s300] sm:$0xff]
        %v372 = vld [vmem:[%s300 + $0x8] sm:$0xff]
        %v373 = vld [vmem:[%s300 + $0x10] sm:$0xff]
        %v374 = vld [vmem:[%s300 + $0x18] sm:$0xff]
        %v375 = vld [vmem:[%s350] sm:$0x1]
        %v377 = vlaneseq
        %v378 = vshrl.u32 %v377, 7
        %v379 = vsub.s32 0, %v378
        %v380 = vrot.slane %v375, %v379
        %vm382 = vcmask 261120
        %v384 = vsel %vm382, %v364, 0
        %v387 = vsel %vm382, %v365, 0
        %v390 = vsel %vm382, %v366, 0
        %v393 = vsel %vm382, %v367, 0
        %v396 = vsel %vm382, %v368, 0
        %v399 = vsel %vm382, %v369, 0
        %v402 = vsel %vm382, %v370, 0
        %404 = vmatprep.subr.mxu0 0.0
        %405 = vmatpush1.msra.mxu0 0.0
        %406 = vmatprep.subr.mxu0 0.0
        %407 = vmatpush1.msra.mxu0 0.0
        %408 = vmatprep.subr.mxu0 0.0
        %409 = vmatpush1.msra.mxu0 0.0
        %410 = vmatprep.subr.mxu0 0.0
        %411 = vmatpush1.msra.mxu0 0.0
        %412 = vmatprep.subr.mxu0 0.0
        %413 = vmatpush1.msra.mxu0 0.0
        %414 = vmatprep.subr.mxu0 0.0
        %415 = vmatpush1.msra.mxu0 0.0
        %416 = vmatprep.subr.mxu0 0.0
        %417 = vmatpush1.msra.mxu0 0.0
        %418 = vmatprep.subr.mxu0 0.0
        %419 = vmatpush1.msra.mxu0 0.0
        %420 = vmatprep.subr.mxu0 0.0
        %421 = vmatpush1.msra.mxu0 0.0
        %422 = vmatprep.subr.mxu0 0.0
        %423 = vmatpush1.msra.mxu0 0.0
        %424 = vmatprep.subr.mxu0 0.0
        %425 = vmatpush1.msra.mxu0 0.0
        %426 = vmatprep.subr.mxu0 0.0
        %427 = vmatpush1.msra.mxu0 0.0
        %428 = vmatprep.subr.mxu0 0.0
        %429 = vmatpush1.msra.mxu0 %v374
        %430 = vmatprep.subr.mxu0 0.0
        %431 = vmatpush1.msra.mxu0 %v373
        %432 = vmatprep.subr.mxu0 0.0
        %433 = vmatpush1.msra.mxu0 %v372
        %434 = vmatprep.subr.mxu0 0.0
        %435 = vmatpush1.msra.mxu0 %v371
        %436 = vmatprep.subr.mxu0 0.0
        %437 = vmatpush2.msra.mxu0 0.0
        %438 = vmatprep.subr.mxu0 0.0
        %439 = vmatpush2.msra.mxu0 0.0
        %440 = vmatprep.subr.mxu0 0.0
        %441 = vmatpush2.msra.mxu0 0.0
        %442 = vmatprep.subr.mxu0 0.0
        %443 = vmatpush2.msra.mxu0 0.0
        %444 = vmatprep.subr.mxu0 0.0
        %445 = vmatpush2.msra.mxu0 0.0
        %446 = vmatprep.subr.mxu0 0.0
        %447 = vmatpush2.msra.mxu0 0.0
        %448 = vmatprep.subr.mxu0 0.0
        %449 = vmatpush2.msra.mxu0 0.0
        %450 = vmatprep.subr.mxu0 0.0
        %451 = vmatpush2.msra.mxu0 0.0
        %452 = vmatprep.subr.mxu0 0.0
        %453 = vmatpush2.msra.mxu0 0.0
        %454 = vmatprep.subr.mxu0 0.0
        %455 = vmatpush2.msra.mxu0 0.0
        %456 = vmatprep.subr.mxu0 0.0
        %457 = vmatpush2.msra.mxu0 0.0
        %458 = vmatprep.subr.mxu0 0.0
        %459 = vmatpush2.msra.mxu0 0.0
        %460 = vmatprep.subr.mxu0 0.0
        %461 = vmatpush2.msra.mxu0 0.0
        %462 = vmatprep.subr.mxu0 0.0
        %463 = vmatpush2.msra.mxu0 0.0
        %464 = vmatprep.subr.mxu0 0.0
        %465 = vmatpush2.msra.mxu0 0.0
        %466 = vmatprep.subr.mxu0 0.0
        %467 = vmatpush2.msra.mxu0 0.0
        %468 = vmatprep.mubr.f32.mxu0 0.0
        %469 = vmatmul.mubr.f32.gmra.mxu0 %v384
        %v470 = vpop.f32.mrf.mxu0
        %v471 = vadd.f32 %v380, %v470
        %v472 = vpop.f32.mrf.mxu0
        %473 = vmatprep.mubr.f32.mxu0 0.0
        %474 = vmatmul.mubr.f32.gmra.mxu0 %v387
        %v475 = vpop.f32.mrf.mxu0
        %v476 = vadd.f32 %v380, %v475
        %v477 = vpop.f32.mrf.mxu0
        %478 = vmatprep.mubr.f32.mxu0 0.0
        %479 = vmatmul.mubr.f32.gmra.mxu0 %v390
        %v480 = vpop.f32.mrf.mxu0
        %v481 = vadd.f32 %v380, %v480
        %v482 = vpop.f32.mrf.mxu0
        %483 = vmatprep.mubr.f32.mxu0 0.0
        %484 = vmatmul.mubr.f32.gmra.mxu0 %v393
        %v485 = vpop.f32.mrf.mxu0
        %v486 = vadd.f32 %v380, %v485
        %v487 = vpop.f32.mrf.mxu0
        %488 = vmatprep.mubr.f32.mxu0 0.0
        %489 = vmatmul.mubr.f32.gmra.mxu0 %v396
        %v490 = vpop.f32.mrf.mxu0
        %v491 = vadd.f32 %v380, %v490
        %v492 = vpop.f32.mrf.mxu0
        %493 = vmatprep.mubr.f32.mxu0 0.0
        %494 = vmatmul.mubr.f32.gmra.mxu0 %v399
        %v495 = vpop.f32.mrf.mxu0
        %v496 = vadd.f32 %v380, %v495
        %v497 = vpop.f32.mrf.mxu0
        %498 = vmatprep.mubr.f32.mxu0 0.0
        %499 = vmatmul.mubr.f32.gmra.mxu0 %v402
        %v500 = vpop.f32.mrf.mxu0
        %v501 = vadd.f32 %v380, %v500
        %v502 = vpop.f32.mrf.mxu0
        %503 = vdwg.mxu0
        %v504 = vxor.u32 %v471, 2147483648
        %v505 = vxor.u32 %v476, 2147483648
        %v506 = vxor.u32 %v481, 2147483648
        %v507 = vxor.u32 %v486, 2147483648
        %v508 = vxor.u32 %v491, 2147483648
        %v509 = vxor.u32 %v496, 2147483648
        %v510 = vxor.u32 %v501, 2147483648
        %v511 = vmul.f32 %v504, 1.442695
        %v512 = vpow.pop %v511
        %v513 = vmul.f32 %v505, 1.442695
        %v514 = vpow.pop %v513
        %v515 = vmul.f32 %v506, 1.442695
        %v516 = vpow.pop %v515
        %v517 = vmul.f32 %v507, 1.442695
        %v518 = vpow.pop %v517
        %v519 = vmul.f32 %v508, 1.442695
        %v520 = vpow.pop %v519
        %v521 = vmul.f32 %v509, 1.442695
        %v522 = vpow.pop %v521
        %v523 = vmul.f32 %v510, 1.442695
        %v524 = vpow.pop %v523
        %v525 = vadd.f32 %v512, 1.0
        %v526 = vadd.f32 %v514, 1.0
        %v527 = vadd.f32 %v516, 1.0
        %v528 = vadd.f32 %v518, 1.0
        %v529 = vadd.f32 %v520, 1.0
        %v530 = vadd.f32 %v522, 1.0
        %v531 = vadd.f32 %v524, 1.0
        %v532 = vrcp.pop %v525
        %v533 = vmul.f32 1.0, %v532
        %v534 = vrcp.pop %v526
        %v535 = vmul.f32 1.0, %v534
        %v536 = vrcp.pop %v527
        %v537 = vmul.f32 1.0, %v536
        %v538 = vrcp.pop %v528
        %v539 = vmul.f32 1.0, %v538
        %v540 = vrcp.pop %v529
        %v541 = vmul.f32 1.0, %v540
        %v542 = vrcp.pop %v530
        %v543 = vmul.f32 1.0, %v542
        %v544 = vrcp.pop %v531
        %v545 = vmul.f32 1.0, %v544
        %v546 = vmul.f32 %v471, %v533
        %v547 = vmul.f32 %v476, %v535
        %v548 = vmul.f32 %v481, %v537
        %v549 = vmul.f32 %v486, %v539
        %v550 = vmul.f32 %v491, %v541
        %v551 = vmul.f32 %v496, %v543
        %v552 = vmul.f32 %v501, %v545
        %v553 = vld [vmem:[#allocation2] sm:$0xff]
        %v554 = vld [vmem:[#allocation2 + $0x8] sm:$0xff]
        %v555 = vld [vmem:[#allocation2 + $0x10] sm:$0xff]
        %v556 = vld [vmem:[#allocation2 + $0x18] sm:$0xff]
        %v557 = vld [vmem:[#allocation2 + $0x20] sm:$0xff]
        %v558 = vld [vmem:[#allocation2 + $0x28] sm:$0xff]
        %v559 = vld [vmem:[#allocation2 + $0x30] sm:$0xff]
        %v560 = vld [vmem:[%s308] sm:$0xff]
        %v561 = vld [vmem:[%s308 + $0x8] sm:$0xff]
        %v562 = vld [vmem:[%s308 + $0x10] sm:$0xff]
        %v563 = vld [vmem:[%s308 + $0x18] sm:$0xff]
        %v564 = vld [vmem:[%s308 + $0x20] sm:$0xff]
        %v565 = vld [vmem:[%s308 + $0x28] sm:$0xff]
        %v566 = vld [vmem:[%s308 + $0x30] sm:$0xff]
        %v567 = vld [vmem:[%s308 + $0x38] sm:$0xff]
        %v568 = vld [vmem:[%s308 + $0x40] sm:$0xff]
        %v569 = vld [vmem:[%s308 + $0x48] sm:$0xff]
        %v570 = vld [vmem:[%s308 + $0x50] sm:$0xff]
        %v571 = vld [vmem:[%s308 + $0x58] sm:$0xff]
        %v572 = vld [vmem:[%s308 + $0x60] sm:$0xff]
        %v573 = vld [vmem:[%s308 + $0x68] sm:$0xff]
        %v574 = vld [vmem:[%s308 + $0x70] sm:$0xff]
        %v575 = vld [vmem:[%s308 + $0x78] sm:$0xff]
        %576 = vmatprep.subr.mxu0 0.0
        %577 = vmatpush1.msra.mxu0 %v575
        %578 = vmatprep.subr.mxu0 0.0
        %579 = vmatpush1.msra.mxu0 %v574
        %580 = vmatprep.subr.mxu0 0.0
        %581 = vmatpush1.msra.mxu0 %v573
        %582 = vmatprep.subr.mxu0 0.0
        %583 = vmatpush1.msra.mxu0 %v572
        %584 = vmatprep.subr.mxu0 0.0
        %585 = vmatpush1.msra.mxu0 %v571
        %586 = vmatprep.subr.mxu0 0.0
        %587 = vmatpush1.msra.mxu0 %v570
        %588 = vmatprep.subr.mxu0 0.0
        %589 = vmatpush1.msra.mxu0 %v569
        %590 = vmatprep.subr.mxu0 0.0
        %591 = vmatpush1.msra.mxu0 %v568
        %592 = vmatprep.subr.mxu0 0.0
        %593 = vmatpush1.msra.mxu0 %v567
        %594 = vmatprep.subr.mxu0 0.0
        %595 = vmatpush1.msra.mxu0 %v566
        %596 = vmatprep.subr.mxu0 0.0
        %597 = vmatpush1.msra.mxu0 %v565
        %598 = vmatprep.subr.mxu0 0.0
        %599 = vmatpush1.msra.mxu0 %v564
        %600 = vmatprep.subr.mxu0 0.0
        %601 = vmatpush1.msra.mxu0 %v563
        %602 = vmatprep.subr.mxu0 0.0
        %603 = vmatpush1.msra.mxu0 %v562
        %604 = vmatprep.subr.mxu0 0.0
        %605 = vmatpush1.msra.mxu0 %v561
        %606 = vmatprep.subr.mxu0 0.0
        %607 = vmatpush1.msra.mxu0 %v560
        %608 = vmatprep.subr.mxu0 0.0
        %609 = vmatpush2.msra.mxu0 0.0
        %610 = vmatprep.subr.mxu0 0.0
        %611 = vmatpush2.msra.mxu0 0.0
        %612 = vmatprep.subr.mxu0 0.0
        %613 = vmatpush2.msra.mxu0 0.0
        %614 = vmatprep.subr.mxu0 0.0
        %615 = vmatpush2.msra.mxu0 0.0
        %616 = vmatprep.subr.mxu0 0.0
        %617 = vmatpush2.msra.mxu0 0.0
        %618 = vmatprep.subr.mxu0 0.0
        %619 = vmatpush2.msra.mxu0 0.0
        %620 = vmatprep.subr.mxu0 0.0
        %621 = vmatpush2.msra.mxu0 0.0
        %622 = vmatprep.subr.mxu0 0.0
        %623 = vmatpush2.msra.mxu0 0.0
        %624 = vmatprep.subr.mxu0 0.0
        %625 = vmatpush2.msra.mxu0 0.0
        %626 = vmatprep.subr.mxu0 0.0
        %627 = vmatpush2.msra.mxu0 0.0
        %628 = vmatprep.subr.mxu0 0.0
        %629 = vmatpush2.msra.mxu0 0.0
        %630 = vmatprep.subr.mxu0 0.0
        %631 = vmatpush2.msra.mxu0 0.0
        %632 = vmatprep.subr.mxu0 0.0
        %633 = vmatpush2.msra.mxu0 0.0
        %634 = vmatprep.subr.mxu0 0.0
        %635 = vmatpush2.msra.mxu0 0.0
        %636 = vmatprep.subr.mxu0 0.0
        %637 = vmatpush2.msra.mxu0 0.0
        %638 = vmatprep.subr.mxu0 0.0
        %639 = vmatpush2.msra.mxu0 0.0
        %640 = vmatprep.mubr.f32.mxu0 0.0
        %641 = vmatmul.mubr.f32.gmra.mxu0 %v546
        %v642 = vpop.f32.mrf.mxu0
        %v643 = vadd.f32 0.0, %v642
        %v644 = vpop.f32.mrf.mxu0
        %645 = vmatprep.mubr.f32.mxu0 0.0
        %646 = vmatmul.mubr.f32.gmra.mxu0 %v547
        %v647 = vpop.f32.mrf.mxu0
        %v648 = vadd.f32 0.0, %v647
        %v649 = vpop.f32.mrf.mxu0
        %650 = vmatprep.mubr.f32.mxu0 0.0
        %651 = vmatmul.mubr.f32.gmra.mxu0 %v548
        %v652 = vpop.f32.mrf.mxu0
        %v653 = vadd.f32 0.0, %v652
        %v654 = vpop.f32.mrf.mxu0
        %655 = vmatprep.mubr.f32.mxu0 0.0
        %656 = vmatmul.mubr.f32.gmra.mxu0 %v549
        %v657 = vpop.f32.mrf.mxu0
        %v658 = vadd.f32 0.0, %v657
        %v659 = vpop.f32.mrf.mxu0
        %660 = vmatprep.mubr.f32.mxu0 0.0
        %661 = vmatmul.mubr.f32.gmra.mxu0 %v550
        %v662 = vpop.f32.mrf.mxu0
        %v663 = vadd.f32 0.0, %v662
        %v664 = vpop.f32.mrf.mxu0
        %665 = vmatprep.mubr.f32.mxu0 0.0
        %666 = vmatmul.mubr.f32.gmra.mxu0 %v551
        %v667 = vpop.f32.mrf.mxu0
        %v668 = vadd.f32 0.0, %v667
        %v669 = vpop.f32.mrf.mxu0
        %670 = vmatprep.mubr.f32.mxu0 0.0
        %671 = vmatmul.mubr.f32.gmra.mxu0 %v552
        %v672 = vpop.f32.mrf.mxu0
        %v673 = vadd.f32 0.0, %v672
        %v674 = vpop.f32.mrf.mxu0
        %675 = vdwg.mxu0
        %v676 = vadd.f32 %v553, %v643
        %v677 = vadd.f32 %v554, %v648
        %v678 = vadd.f32 %v555, %v653
        %v679 = vadd.f32 %v556, %v658
        %v680 = vadd.f32 %v557, %v663
        %v681 = vadd.f32 %v558, %v668
        %v682 = vadd.f32 %v559, %v673
        %683 = vst [vmem:[#allocation2] sm:$0xff] %v676
        %684 = vst [vmem:[#allocation2 + $0x8] sm:$0xff] %v677
        %685 = vst [vmem:[#allocation2 + $0x10] sm:$0xff] %v678
        %686 = vst [vmem:[#allocation2 + $0x18] sm:$0xff] %v679
        %687 = vst [vmem:[#allocation2 + $0x20] sm:$0xff] %v680
        %688 = vst [vmem:[#allocation2 + $0x28] sm:$0xff] %v681
        %689 = vst [vmem:[#allocation2 + $0x30] sm:$0xff] %v682
        %p690 = scmp.eq.s32.totalorder %s25, 1
        // Predicated region
        $region87: #{tpu_custom_call.1} parent=73 // pred_check
          %p691 = pneg %p690
        $region88: #{tpu_custom_call.1} parent=73 // pred_check_branch
          %693 = sbr.rel (%p691) target = $region90
        $region89: #{tpu_custom_call.1} parent=73 // pred_region
          %v694 = vld [vmem:[#allocation2] sm:$0xff]
          %v695 = vld [vmem:[#allocation2 + $0x8] sm:$0xff]
          %v696 = vld [vmem:[#allocation2 + $0x10] sm:$0xff]
          %v697 = vld [vmem:[#allocation2 + $0x18] sm:$0xff]
          %v698 = vld [vmem:[#allocation2 + $0x20] sm:$0xff]
          %v699 = vld [vmem:[#allocation2 + $0x28] sm:$0xff]
          %v700 = vld [vmem:[#allocation2 + $0x30] sm:$0xff]
          %v701 = vld [vmem:[%s4] sm:$0x1]
          %v703 = vlaneseq
          %v704 = vshrl.u32 %v703, 7
          %v705 = vsub.s32 0, %v704
          %v706 = vrot.slane %v701, %v705
          %v708 = vadd.f32 %v694, %v706
          %v709 = vadd.f32 %v695, %v706
          %v710 = vadd.f32 %v696, %v706
          %v711 = vadd.f32 %v697, %v706
          %v712 = vadd.f32 %v698, %v706
          %v713 = vadd.f32 %v699, %v706
          %v714 = vadd.f32 %v700, %v706
          %715 = vst [vmem:[#allocation7] sm:$0xff] %v708
          %716 = vst [vmem:[#allocation7 + $0x8] sm:$0xff] %v709
          %717 = vst [vmem:[#allocation7 + $0x10] sm:$0xff] %v710
          %718 = vst [vmem:[#allocation7 + $0x18] sm:$0xff] %v711
          %719 = vst [vmem:[#allocation7 + $0x20] sm:$0xff] %v712
          %720 = vst [vmem:[#allocation7 + $0x28] sm:$0xff] %v713
          %721 = vst [vmem:[#allocation7 + $0x30] sm:$0xff] %v714
        $region90: #{tpu_custom_call.1} parent=73 // pred_fallthru
          _
        // Predicated region
        $region91: #{tpu_custom_call.1} parent=73 // pred_check
          %p722 = pneg %p175
        $region92: #{tpu_custom_call.1} parent=73 // pred_check_branch
          %724 = sbr.rel (%p722) target = $region94
        $region93: #{tpu_custom_call.1} parent=73 // pred_region
          %s725 = smul.u32 7, %s24
          %s727 = ssub.s32 896, 896
          %728 = vsyncadd [#allocation6], %s727
          %s729 = smul.addr %s725, 128
          %s730 = scalar_lea.hbm %s5, %s729
          %s731 = sshll.u32 [#allocation7], 4
          %s732 = int_to_ptr.vmem [resolvable:$true] %s731
          %737 = dma.vmem_to_hbm [thread:$0]  %s732, 896, %s730, [#allocation6], 128, 128, 8
        $region94: #{tpu_custom_call.1} parent=73 // pred_fallthru
          _
        // Predicated region
        $region95: #{tpu_custom_call.1} parent=73 // pred_check
          %p738 = pneg %p175
        $region96: #{tpu_custom_call.1} parent=73 // pred_check_branch
          %740 = sbr.rel (%p738) target = $region98
        $region97: #{tpu_custom_call.1} parent=73 // pred_region
          %741 = dma.done [#allocation6], 896
        $region98: #{tpu_custom_call.1} parent=73 // pred_fallthru
          _
      $region74: #{tpu_custom_call.1} parent=5 // pred_fallthru
        _
      %p742 = scmp.le.s32.totalorder 2, %s15
      // Predicated region
      $region99: #{tpu_custom_call.1} parent=5 // pred_check
        %p743 = pneg %p742
      $region100: #{tpu_custom_call.1} parent=5 // pred_check_branch
        %745 = sbr.rel (%p743) target = $region102
      $region101: #{tpu_custom_call.1} parent=5 // pred_region
        %s746 = ssub.s32 %s15, 2
      $region102: #{tpu_custom_call.1} parent=5 // pred_fallthru
        _
    $region6: #{tpu_custom_call.1} parent=1 // loop_footer
      %s19 = sadd.s32 1, %s15
    $region7: #{tpu_custom_call.1} parent=1 // loop_footer_branch
      %14 = sbr.rel target = $region3
    $region8: #{tpu_custom_call.1} parent=1 // loop_exit
      _
    %747 = vsyncpa [#allocation5], 1
    %s748 = scalar_lea.sflag [#allocation5], 1
    %749 = vsyncpa %s748, 1
    %750 = vsyncpa [#allocation6], 1
    %s751 = scalar_lea.sflag [#allocation6], 1
    %752 = vsyncpa %s751, 1

</llo_original>
